<compile_context>
chip_gen: v5e
topology: v5e:2x2
jax: 0.10.0
libtpu: 0.0.40
codegen_flags: <defaults>
</compile_context>

<pallas_src>
import functools

import jax
import jax.numpy as jnp
from jax import lax
from jax.experimental import pallas as pl
from jax.experimental.pallas import tpu as pltpu


def fa_layer_kernel(adj_ref, a_dst_ref, a_src_ref, hs_ref, d_dst_ref, z_ref):
    j = pl.program_id(1)

    @pl.when(j == 0)
    def _():
        z_ref[...] = jnp.zeros_like(z_ref)

    # g[v, u] = tanh(h[v].w_dst + h[u].w_src + b); bias pre-folded into a_dst.
    g = jnp.tanh(a_dst_ref[...] + a_src_ref[...])            # [Tdst, Tsrc] EUP
    # Mask by the int8 adjacency: compare + select, no cast/multiply.
    e = jnp.where(adj_ref[...] != 0, g, 0.0)                  # [Tdst, Tsrc] VPU
    # TODO(synk): training-mode dropout on e omitted (inference / identity).
    # TODO(synk): block-sparse skipping of empty (dst, src) tiles via scalar
    #             prefetch is a further win for real sparse graphs.
    # Partial aggregation: E @ (d * h).  hs carries the MXU operand dtype
    # (bf16 by default -> single-pass matmul); accumulation stays f32 in the
    # resident output block (its block index is constant over j).
    z_ref[...] += jnp.dot(e.astype(hs_ref.dtype), hs_ref[...],
                          preferred_element_type=jnp.float32)

    @pl.when(j == pl.num_programs(1) - 1)
    def _():
        # z[v] = d[v] * sum_u e[v,u] * (d[u] * h[u]); lane-dense store.
        z_ref[...] = z_ref[...] * d_dst_ref[...]


def _round_up(x, m):
    return (x + m - 1) // m * m


def _choose_tile(n_pad, requested, min_tiles=1):
    """Largest multiple-of-128 divisor of n_pad that is <= requested.

    Keeps padding bounded (<128 per dim).  If min_tiles > 1 and the padded
    size allows it, also guarantees at least `min_tiles` tiles along the axis
    (keeps both v7x TensorCores busy on the 'parallel' dst axis)."""
    m = n_pad // 128
    requested = max(int(requested), 128)
    best = 128
    for k in range(1, m + 1):
        if m % k != 0:
            continue
        tile = 128 * k
        if tile > requested:
            continue
        if m >= min_tiles and m // k < min_tiles:
            continue
        best = tile
    return best


def prepare_adjacency(adj, n_pad):
    """One-time conversion of the dense adjacency to the kernel layout.

    Hoisted out of the per-call hot path: cast to int8 (0/1 exact) and pad to
    a multiple of 128.  adj[dst, src] = 1 for edge src -> dst."""
    n = adj.shape[0]
    adj_i8 = (adj != 0).astype(jnp.int8)
    return jnp.pad(adj_i8, ((0, n_pad - n), (0, n_pad - n)))


@functools.partial(jax.jit, static_argnames=("tdst", "tsrc", "matmul_dtype"))
def fa_layer_forward(h, adj_p, d, gate_w, gate_b, *,
                     tdst=1024, tsrc=2048, matmul_dtype=jnp.bfloat16):
    """FAGCN FALayer forward (dropout = identity).

    h: [N, D] node features; adj_p: [Np, Np] int8 adjacency pre-padded to a
    multiple of 128 (see prepare_adjacency); d: [N] degree norm (deg^-1/2);
    gate_w: [1, 2D]; gate_b: [1].  matmul_dtype controls the MXU operand dtype
    of the masked aggregation (bf16 default; f32 for bit-tight checks)."""
    N, D = h.shape
    np_ = _round_up(N, 128)
    assert adj_p.shape == (np_, np_), (
        "adjacency must be pre-padded to a multiple of 128; "
        "use prepare_adjacency(adj, n_pad)")
    pad_n = np_ - N

    # Tiles = multiple-of-128 divisors of the padded size (no lcm blow-up).
    tdst = _choose_tile(np_, tdst, min_tiles=2)   # >=2 dst tiles when possible
    tsrc = _choose_tile(np_, tsrc, min_tiles=1)

    h32 = h.astype(jnp.float32)
    d32 = d.astype(jnp.float32)
    w_dst = gate_w[0, :D].astype(jnp.float32)
    w_src = gate_w[0, D:].astype(jnp.float32)
    b = gate_b[0].astype(jnp.float32)

    # O(N*D) per-node prep (lane-friendly layouts for the kernel).
    hi = lax.Precision.HIGHEST
    a_dst = (jnp.dot(h32, w_dst, precision=hi) + b).reshape(N, 1)   # [N, 1]
    a_src = jnp.dot(h32, w_src, precision=hi).reshape(1, N)         # [1, N]
    hs = (h32 * d32[:, None]).astype(matmul_dtype)                  # d folded
    d_col = d32.reshape(N, 1)

    a_dst_p = jnp.pad(a_dst, ((0, pad_n), (0, 0)))
    a_src_p = jnp.pad(a_src, ((0, 0), (0, pad_n)))
    hs_p = jnp.pad(hs, ((0, pad_n), (0, 0)))
    d_p = jnp.pad(d_col, ((0, pad_n), (0, 0)))

    grid = (np_ // tdst, np_ // tsrc)   # dst tiles (parallel), src (reduction)
    z_p = pl.pallas_call(
        fa_layer_kernel,
        out_shape=jax.ShapeDtypeStruct((np_, D), jnp.float32),
        grid_spec=pltpu.PrefetchScalarGridSpec(
            num_scalar_prefetch=0,
            grid=grid,
            in_specs=[
                pl.BlockSpec((tdst, tsrc), lambda i, j: (i, j)),   # adj (int8)
                pl.BlockSpec((tdst, 1), lambda i, j: (i, 0)),      # a_dst (+b)
                pl.BlockSpec((1, tsrc), lambda i, j: (0, j)),      # a_src row
                pl.BlockSpec((tsrc, D), lambda i, j: (j, 0)),      # d*h
                pl.BlockSpec((tdst, 1), lambda i, j: (i, 0)),      # d (dst)
            ],
            out_specs=pl.BlockSpec((tdst, D), lambda i, j: (i, 0)),
        ),
        compiler_params=pltpu.CompilerParams(
            dimension_semantics=("parallel", "arbitrary"),
            vmem_limit_bytes=32 * 1024 * 1024),
    )(adj_p, a_dst_p, a_src_p, hs_p, d_p)
    return z_p[:N].astype(h.dtype)


def fa_layer_reference(h, src, dst, d, gate_w, gate_b):
    """Edge-list reference matching the PyTorch/DGL semantics."""
    h2 = jnp.concatenate([h[dst], h[src]], axis=1)                       # [E, 2D]
    g = jnp.tanh(jnp.dot(h2, gate_w.T, precision=lax.Precision.HIGHEST)
                 + gate_b).squeeze(-1)                                   # [E]
    e = g * d[dst] * d[src]                                              # [E]
    m = e[:, None] * h[src]                                              # [E, D]
    z = jnp.zeros_like(h).at[dst].add(m)
    return z


def _make_case(key, N, D):
    k_h, k_adj, k_w, k_b = jax.random.split(key, 4)
    # node features
    h = jax.random.normal(k_h, (N, D), dtype=jnp.float32)
    # random adjacency (adj[dst, src]); ~10% density
    adj = (jax.random.uniform(k_adj, (N, N)) < 0.1).astype(jnp.float32)
    # degree normalization d = deg^{-1/2} (as precomputed in FAGCN)
    deg = jnp.maximum(adj.sum(axis=1), 1.0)
    d = deg ** -0.5
    # gate = nn.Linear(2*D, 1); xavier_normal_(weight, gain=1.414)
    gain = 1.414
    std = gain * jnp.sqrt(2.0 / (2 * D + 1))
    gate_w = std * jax.random.normal(k_w, (1, 2 * D), dtype=jnp.float32)
    bound = 1.0 / jnp.sqrt(2.0 * D)
    gate_b = jax.random.uniform(k_b, (1,), minval=-bound, maxval=bound,
                                dtype=jnp.float32)
    return h, adj, d, gate_w, gate_b


if __name__ == "__main__":
    D = 32
    key = jax.random.PRNGKey(0)

    # (N, matmul_dtype, atol, rtol):
    #  - 128 / f32: strict numerical check of the f32 MXU path
    #  - 128 / bf16: default fast path (single-pass MXU), looser tolerance
    #  - 200 / bf16: exercises the bounded 128-padding path (N % 128 != 0)
    cases = [
        (128, jnp.float32, 1e-4, 1e-4),
        (128, jnp.bfloat16, 2e-2, 2e-2),
        (200, jnp.bfloat16, 2e-2, 2e-2),
    ]

    graphs = {n: _make_case(jax.random.fold_in(key, n), n, D)
              for n in sorted({c[0] for c in cases})}

    for N, mm_dtype, atol, rtol in cases:
        h, adj, d, gate_w, gate_b = graphs[N]

        # One-time adjacency conversion (int8 + pad), outside the hot path.
        n_pad = _round_up(N, 128)
        adj_p = prepare_adjacency(adj, n_pad)

        z = fa_layer_forward(h, adj_p, d, gate_w, gate_b,
                             matmul_dtype=mm_dtype)
        jax.block_until_ready(z)

        # check against edge-list reference
        nnz = int(adj.sum())
        dst_idx, src_idx = jnp.nonzero(adj, size=nnz)
        z_ref = fa_layer_reference(h, src_idx, dst_idx, d, gate_w, gate_b)
        assert jnp.allclose(z, z_ref, atol=atol, rtol=rtol), (
            f"mismatch vs reference (N={N}, matmul_dtype={mm_dtype})")

    print("KERNEL_OK")
</pallas_src>

<mosaic_0001>
module attributes {stable_mosaic.version = 11 : i64} {
  func.func @fa_layer_kernel(%arg0: i32, %arg1: i32, %arg2: memref<128x128xi8, #tpu.memory_space<vmem>>, %arg3: memref<128x1xf32, #tpu.memory_space<vmem>>, %arg4: memref<1x128xf32, #tpu.memory_space<vmem>>, %arg5: memref<128x32xf32, #tpu.memory_space<vmem>>, %arg6: memref<128x1xf32, #tpu.memory_space<vmem>>, %arg7: memref<128x32xf32, #tpu.memory_space<vmem>>) attributes {dimension_semantics = [#tpu.dimension_semantics<parallel>, #tpu.dimension_semantics<arbitrary>], iteration_bounds = array<i64: 1, 1>, scalar_prefetch = 0 : i64, scratch_operands = 0 : i64, tpu.core_type = #tpu.core_type<tc>, window_params = [{transform_indices = @transform_0, window_bounds = array<i64: 128, 128>}, {transform_indices = @transform_1, window_bounds = array<i64: 128, 1>}, {transform_indices = @transform_2, window_bounds = array<i64: 1, 128>}, {transform_indices = @transform_3, window_bounds = array<i64: 128, 32>}, {transform_indices = @transform_4, window_bounds = array<i64: 128, 1>}, {transform_indices = @transform_5, window_bounds = array<i64: 128, 32>}]} {
    %c0_i32 = arith.constant 0 : i32
    %0 = arith.cmpi eq, %arg1, %c0_i32 : i32
    %1 = arith.extui %0 : i1 to i32
    %c0_i32_0 = arith.constant 0 : i32
    %2 = arith.cmpi ne, %1, %c0_i32_0 : i32
    scf.if %2 {
      %cst_15 = arith.constant 0.000000e+00 : f32
      %22 = vector.broadcast %cst_15 : f32 to vector<128x32xf32>
      %c0_16 = arith.constant 0 : index
      %c0_17 = arith.constant 0 : index
      %23 = vector.load %arg7[%c0_16, %c0_17] : memref<128x32xf32, #tpu.memory_space<vmem>>, vector<128x32xf32>
      tpu.vector_store %arg7[%c0_16, %c0_17], %22 {strides = array<i32>} : memref<128x32xf32, #tpu.memory_space<vmem>>, vector<128x32xf32>,
    } else {
    }
    %c0 = arith.constant 0 : index
    %c0_1 = arith.constant 0 : index
    %3 = vector.load %arg3[%c0, %c0_1] : memref<128x1xf32, #tpu.memory_space<vmem>>, vector<128x1xf32>
    %c0_2 = arith.constant 0 : index
    %c0_3 = arith.constant 0 : index
    %4 = vector.load %arg4[%c0_2, %c0_3] : memref<1x128xf32, #tpu.memory_space<vmem>>, vector<1x128xf32>
    %5 = vector.broadcast %3 : vector<128x1xf32> to vector<128x128xf32>
    %6 = vector.broadcast %4 : vector<1x128xf32> to vector<128x128xf32>
    %7 = arith.addf %5, %6 : vector<128x128xf32>
    %8 = math.tanh %7 : vector<128x128xf32>
    %c0_4 = arith.constant 0 : index
    %c0_5 = arith.constant 0 : index
    %9 = vector.load %arg2[%c0_4, %c0_5] : memref<128x128xi8, #tpu.memory_space<vmem>>, vector<128x128xi8>
    %c0_i8 = arith.constant 0 : i8
    %10 = vector.broadcast %c0_i8 : i8 to vector<128x128xi8>
    %11 = arith.cmpi ne, %9, %10 : vector<128x128xi8>
    %cst = arith.constant 0.000000e+00 : f32
    %12 = vector.broadcast %cst : f32 to vector<128x128xf32>
    %13 = arith.select %11, %8, %12 : vector<128x128xi1>, vector<128x128xf32>
    %c0_6 = arith.constant 0 : index
    %c0_7 = arith.constant 0 : index
    %14 = vector.load %arg7[%c0_6, %c0_7] : memref<128x32xf32, #tpu.memory_space<vmem>>, vector<128x32xf32>
    %c0_8 = arith.constant 0 : index
    %c0_9 = arith.constant 0 : index
    %15 = vector.load %arg5[%c0_8, %c0_9] : memref<128x32xf32, #tpu.memory_space<vmem>>, vector<128x32xf32>
    %cst_10 = arith.constant dense<0.000000e+00> : vector<128x32xf32>
    %16 = tpu.matmul %13, %15, %cst_10 {dimension_numbers = #tpu.dot_dimension_numbers<[1], [0], [0], [1], [0, 0, 1, 1], [], []>} : vector<128x128xf32>, vector<128x32xf32>, vector<128x32xf32> -> vector<128x32xf32>
    %17 = arith.addf %14, %16 : vector<128x32xf32>
    %c0_11 = arith.constant 0 : index
    %c0_12 = arith.constant 0 : index
    %18 = vector.load %arg7[%c0_11, %c0_12] : memref<128x32xf32, #tpu.memory_space<vmem>>, vector<128x32xf32>
    tpu.vector_store %arg7[%c0_11, %c0_12], %17 {strides = array<i32>} : memref<128x32xf32, #tpu.memory_space<vmem>>, vector<128x32xf32>,
    %c0_i32_13 = arith.constant 0 : i32
    %19 = arith.cmpi eq, %arg1, %c0_i32_13 : i32
    %20 = arith.extui %19 : i1 to i32
    %c0_i32_14 = arith.constant 0 : i32
    %21 = arith.cmpi ne, %20, %c0_i32_14 : i32
    scf.if %21 {
      %c0_15 = arith.constant 0 : index
      %c0_16 = arith.constant 0 : index
      %22 = vector.load %arg7[%c0_15, %c0_16] : memref<128x32xf32, #tpu.memory_space<vmem>>, vector<128x32xf32>
      %c0_17 = arith.constant 0 : index
      %c0_18 = arith.constant 0 : index
      %23 = vector.load %arg6[%c0_17, %c0_18] : memref<128x1xf32, #tpu.memory_space<vmem>>, vector<128x1xf32>
      %24 = vector.broadcast %23 : vector<128x1xf32> to vector<128x32xf32>
      %25 = arith.mulf %22, %24 : vector<128x32xf32>
      %c0_19 = arith.constant 0 : index
      %c0_20 = arith.constant 0 : index
      %26 = vector.load %arg7[%c0_19, %c0_20] : memref<128x32xf32, #tpu.memory_space<vmem>>, vector<128x32xf32>
      tpu.vector_store %arg7[%c0_19, %c0_20], %25 {strides = array<i32>} : memref<128x32xf32, #tpu.memory_space<vmem>>, vector<128x32xf32>,
    } else {
    }
    return
  }
  func.func @transform_0(%arg0: i32, %arg1: i32) -> (i32, i32) {
    %c0_i32 = arith.constant 0 : i32
    return %arg0, %arg1 : i32, i32
  }
  func.func @transform_1(%arg0: i32, %arg1: i32) -> (i32, i32) {
    %c0_i32 = arith.constant 0 : i32
    %c0_i32_0 = arith.constant 0 : i32
    return %arg0, %c0_i32 : i32, i32
  }
  func.func @transform_2(%arg0: i32, %arg1: i32) -> (i32, i32) {
    %c0_i32 = arith.constant 0 : i32
    %c0_i32_0 = arith.constant 0 : i32
    return %c0_i32, %arg1 : i32, i32
  }
  func.func @transform_3(%arg0: i32, %arg1: i32) -> (i32, i32) {
    %c0_i32 = arith.constant 0 : i32
    %c0_i32_0 = arith.constant 0 : i32
    return %arg1, %c0_i32 : i32, i32
  }
  func.func @transform_4(%arg0: i32, %arg1: i32) -> (i32, i32) {
    %c0_i32 = arith.constant 0 : i32
    %c0_i32_0 = arith.constant 0 : i32
    return %arg0, %c0_i32 : i32, i32
  }
  func.func @transform_5(%arg0: i32, %arg1: i32) -> (i32, i32) {
    %c0_i32 = arith.constant 0 : i32
    %c0_i32_0 = arith.constant 0 : i32
    return %arg0, %c0_i32 : i32, i32
  }
}

</mosaic_0001>

<llo_original>
// kernel: fa_layer_forward.1
$region0: #{fa_layer_forward.1}
  #allocation0 [shape = 'u32[]', space=smem, size = 0x4, offset = 0x4, fixed_abs, tag = 'smem constant byte address 0x4 - core index']
  #allocation1 [shape = 'u32[72,128]{1,0:T(1,128)}', space=vmem, size = 0x9000, scoped, tag = 'internal scratch']
  %s0 = inlined_call_operand.vmem [shape: s8[128,128], index: 0, kind: input, shape index: {}]
  %s1 = inlined_call_operand.vmem [shape: f32[128,1], index: 1, kind: input, shape index: {}]
  %s2 = inlined_call_operand.vmem [shape: f32[1,128], index: 2, kind: input, shape index: {}]
  %s3 = inlined_call_operand.vmem [shape: f32[128,32], index: 3, kind: input, shape index: {}]
  %s4 = inlined_call_operand.vmem [shape: f32[128,1], index: 4, kind: input, shape index: {}]
  %s5 = inlined_call_operand.vmem [shape: f32[128,32], index: 5, kind: output, shape index: {}]
  %s6 = sld [smem:[#allocation0]]
  $region38: #{fa_layer_forward.1} parent=0
    _
  %s8 = ssub.s32 1, %s6
  %s9 = scalar_select 0, %s8, %s6
  // Predicated region
  $region2: #{fa_layer_forward.1} parent=0 // pred_check
    _
  $region3: #{fa_layer_forward.1} parent=0 // pred_check_branch
    %11 = sbr.rel (0) target = $region5
  $region4: #{fa_layer_forward.1} parent=0 // pred_region
    _
  $region5: #{fa_layer_forward.1} parent=0 // pred_fallthru
    _
  // Predicated region
  $region6: #{fa_layer_forward.1} parent=0 // pred_check
    _
  $region7: #{fa_layer_forward.1} parent=0 // pred_check_branch
    %13 = sbr.rel (0) target = $region9
  $region8: #{fa_layer_forward.1} parent=0 // pred_region
    _
  $region9: #{fa_layer_forward.1} parent=0 // pred_fallthru
    _
  // Predicated region
  $region10: #{fa_layer_forward.1} parent=0 // pred_check
    _
  $region11: #{fa_layer_forward.1} parent=0 // pred_check_branch
    %15 = sbr.rel (0) target = $region13
  $region12: #{fa_layer_forward.1} parent=0 // pred_region
    _
  $region13: #{fa_layer_forward.1} parent=0 // pred_fallthru
    _
  // Predicated region
  $region14: #{fa_layer_forward.1} parent=0 // pred_check
    _
  $region15: #{fa_layer_forward.1} parent=0 // pred_check_branch
    %17 = sbr.rel (0) target = $region17
  $region16: #{fa_layer_forward.1} parent=0 // pred_region
    _
  $region17: #{fa_layer_forward.1} parent=0 // pred_fallthru
    _
  // Predicated region
  $region18: #{fa_layer_forward.1} parent=0 // pred_check
    _
  $region19: #{fa_layer_forward.1} parent=0 // pred_check_branch
    %19 = sbr.rel (0) target = $region21
  $region20: #{fa_layer_forward.1} parent=0 // pred_region
    _
  $region21: #{fa_layer_forward.1} parent=0 // pred_fallthru
    _
  %p22 = scmp.eq.s32.totalorder 0, 0
  // Predicated region
  $region22: #{fa_layer_forward.1} parent=0 // pred_check
    %p23 = pneg %p22
  $region23: #{fa_layer_forward.1} parent=0 // pred_check_branch
    %25 = sbr.rel (%p23) target = $region25
  $region24: #{fa_layer_forward.1} parent=0 // pred_region
    %vm26 = vcmask 261120
    %27 = vst.msk [vmem:[%s5] sm:$0xff] %vm26, 0.0
    %28 = vst.msk [vmem:[%s5 + $0x8] sm:$0xff] %vm26, 0.0
    %29 = vst.msk [vmem:[%s5 + $0x10] sm:$0xff] %vm26, 0.0
    %30 = vst.msk [vmem:[%s5 + $0x18] sm:$0xff] %vm26, 0.0
    %31 = vst.msk [vmem:[%s5 + $0x20] sm:$0xff] %vm26, 0.0
    %32 = vst.msk [vmem:[%s5 + $0x28] sm:$0xff] %vm26, 0.0
    %33 = vst.msk [vmem:[%s5 + $0x30] sm:$0xff] %vm26, 0.0
    %34 = vst.msk [vmem:[%s5 + $0x38] sm:$0xff] %vm26, 0.0
    %35 = vst.msk [vmem:[%s5 + $0x40] sm:$0xff] %vm26, 0.0
    %36 = vst.msk [vmem:[%s5 + $0x48] sm:$0xff] %vm26, 0.0
    %37 = vst.msk [vmem:[%s5 + $0x50] sm:$0xff] %vm26, 0.0
    %38 = vst.msk [vmem:[%s5 + $0x58] sm:$0xff] %vm26, 0.0
    %39 = vst.msk [vmem:[%s5 + $0x60] sm:$0xff] %vm26, 0.0
    %40 = vst.msk [vmem:[%s5 + $0x68] sm:$0xff] %vm26, 0.0
    %41 = vst.msk [vmem:[%s5 + $0x70] sm:$0xff] %vm26, 0.0
    %42 = vst.msk [vmem:[%s5 + $0x78] sm:$0xff] %vm26, 0.0
  $region25: #{fa_layer_forward.1} parent=0 // pred_fallthru
    _
  %v43 = vld [vmem:[%s1] sm:$0xff]
  %v44 = vld [vmem:[%s1 + $0x8] sm:$0xff]
  %v45 = vld [vmem:[%s1 + $0x10] sm:$0xff]
  %v46 = vld [vmem:[%s1 + $0x18] sm:$0xff]
  %v47 = vld [vmem:[%s1 + $0x20] sm:$0xff]
  %v48 = vld [vmem:[%s1 + $0x28] sm:$0xff]
  %v49 = vld [vmem:[%s1 + $0x30] sm:$0xff]
  %v50 = vld [vmem:[%s1 + $0x38] sm:$0xff]
  %v51 = vld [vmem:[%s1 + $0x40] sm:$0xff]
  %v52 = vld [vmem:[%s1 + $0x48] sm:$0xff]
  %v53 = vld [vmem:[%s1 + $0x50] sm:$0xff]
  %v54 = vld [vmem:[%s1 + $0x58] sm:$0xff]
  %v55 = vld [vmem:[%s1 + $0x60] sm:$0xff]
  %v56 = vld [vmem:[%s1 + $0x68] sm:$0xff]
  %v57 = vld [vmem:[%s1 + $0x70] sm:$0xff]
  %v58 = vld [vmem:[%s1 + $0x78] sm:$0xff]
  %v59 = vld [vmem:[%s2] sm:$0x1]
  %61 = vset.pattern.permute.xlu0 0
  %62 = vperm.xlu0 %61, %v43
  %v63 = vpop.permute.xlu0 %62
  %66 = vset.pattern.permute.xlu0 0
  %67 = vperm.xlu0 %66, %v44
  %v68 = vpop.permute.xlu0 %67
  %71 = vset.pattern.permute.xlu0 0
  %72 = vperm.xlu0 %71, %v45
  %v73 = vpop.permute.xlu0 %72
  %76 = vset.pattern.permute.xlu0 0
  %77 = vperm.xlu0 %76, %v46
  %v78 = vpop.permute.xlu0 %77
  %81 = vset.pattern.permute.xlu0 0
  %82 = vperm.xlu0 %81, %v47
  %v83 = vpop.permute.xlu0 %82
  %86 = vset.pattern.permute.xlu0 0
  %87 = vperm.xlu0 %86, %v48
  %v88 = vpop.permute.xlu0 %87
  %91 = vset.pattern.permute.xlu0 0
  %92 = vperm.xlu0 %91, %v49
  %v93 = vpop.permute.xlu0 %92
  %96 = vset.pattern.permute.xlu0 0
  %97 = vperm.xlu0 %96, %v50
  %v98 = vpop.permute.xlu0 %97
  %101 = vset.pattern.permute.xlu0 0
  %102 = vperm.xlu0 %101, %v51
  %v103 = vpop.permute.xlu0 %102
  %106 = vset.pattern.permute.xlu0 0
  %107 = vperm.xlu0 %106, %v52
  %v108 = vpop.permute.xlu0 %107
  %111 = vset.pattern.permute.xlu0 0
  %112 = vperm.xlu0 %111, %v53
  %v113 = vpop.permute.xlu0 %112
  %116 = vset.pattern.permute.xlu0 0
  %117 = vperm.xlu0 %116, %v54
  %v118 = vpop.permute.xlu0 %117
  %121 = vset.pattern.permute.xlu0 0
  %122 = vperm.xlu0 %121, %v55
  %v123 = vpop.permute.xlu0 %122
  %126 = vset.pattern.permute.xlu0 0
  %127 = vperm.xlu0 %126, %v56
  %v128 = vpop.permute.xlu0 %127
  %131 = vset.pattern.permute.xlu0 0
  %132 = vperm.xlu0 %131, %v57
  %v133 = vpop.permute.xlu0 %132
  %136 = vset.pattern.permute.xlu0 0
  %137 = vperm.xlu0 %136, %v58
  %v138 = vpop.permute.xlu0 %137
  %v141 = vperm.slane %v59, 0
  %v143 = vadd.f32 %v63, %v141
  %v144 = vadd.f32 %v68, %v141
  %v145 = vadd.f32 %v73, %v141
  %v146 = vadd.f32 %v78, %v141
  %v147 = vadd.f32 %v83, %v141
  %v148 = vadd.f32 %v88, %v141
  %v149 = vadd.f32 %v93, %v141
  %v150 = vadd.f32 %v98, %v141
  %v151 = vadd.f32 %v103, %v141
  %v152 = vadd.f32 %v108, %v141
  %v153 = vadd.f32 %v113, %v141
  %v154 = vadd.f32 %v118, %v141
  %v155 = vadd.f32 %v123, %v141
  %v156 = vadd.f32 %v128, %v141
  %v157 = vadd.f32 %v133, %v141
  %v158 = vadd.f32 %v138, %v141
  %v159 = vtanh.pop %v143
  %v160 = vtanh.pop %v144
  %v161 = vtanh.pop %v145
  %v162 = vtanh.pop %v146
  %v163 = vtanh.pop %v147
  %v164 = vtanh.pop %v148
  %v165 = vtanh.pop %v149
  %v166 = vtanh.pop %v150
  %v167 = vtanh.pop %v151
  %v168 = vtanh.pop %v152
  %v169 = vtanh.pop %v153
  %v170 = vtanh.pop %v154
  %v171 = vtanh.pop %v155
  %v172 = vtanh.pop %v156
  %v173 = vtanh.pop %v157
  %v174 = vtanh.pop %v158
  %v175 = vld [vmem:[%s0] sm:$0xff]
  %v176 = vld [vmem:[%s0 + $0x8] sm:$0xff]
  %v177 = vld [vmem:[%s0 + $0x10] sm:$0xff]
  %v178 = vld [vmem:[%s0 + $0x18] sm:$0xff]
  %vm179 = vnez %v175
  %vm180 = vnez %v176
  %vm181 = vnez %v177
  %vm182 = vnez %v178
  %v183 = vsel %vm179, 16843009, 0
  %v184 = vsel %vm180, 16843009, 0
  %v185 = vsel %vm181, 16843009, 0
  %v186 = vsel %vm182, 16843009, 0
  %v187 = vunpack.c.0.s8 %v183
  %v188 = vunpack.c.1.s8 %v183
  %v189 = vunpack.c.2.s8 %v183
  %v190 = vunpack.c.3.s8 %v183
  %v191 = vunpack.c.0.s8 %v184
  %v192 = vunpack.c.1.s8 %v184
  %v193 = vunpack.c.2.s8 %v184
  %v194 = vunpack.c.3.s8 %v184
  %v195 = vunpack.c.0.s8 %v185
  %v196 = vunpack.c.1.s8 %v185
  %v197 = vunpack.c.2.s8 %v185
  %v198 = vunpack.c.3.s8 %v185
  %v199 = vunpack.c.0.s8 %v186
  %v200 = vunpack.c.1.s8 %v186
  %v201 = vunpack.c.2.s8 %v186
  %v202 = vunpack.c.3.s8 %v186
  %v203 = vpack.c.b16 %v187, %v187
  %v204 = vpack.c.b8 %v203, %v203
  %v205 = vpack.c.b16 %v188, %v188
  %v206 = vpack.c.b8 %v205, %v205
  %v207 = vpack.c.b16 %v189, %v189
  %v208 = vpack.c.b8 %v207, %v207
  %v209 = vpack.c.b16 %v190, %v190
  %v210 = vpack.c.b8 %v209, %v209
  %v211 = vpack.c.b16 %v191, %v191
  %v212 = vpack.c.b8 %v211, %v211
  %v213 = vpack.c.b16 %v192, %v192
  %v214 = vpack.c.b8 %v213, %v213
  %v215 = vpack.c.b16 %v193, %v193
  %v216 = vpack.c.b8 %v215, %v215
  %v217 = vpack.c.b16 %v194, %v194
  %v218 = vpack.c.b8 %v217, %v217
  %v219 = vpack.c.b16 %v195, %v195
  %v220 = vpack.c.b8 %v219, %v219
  %v221 = vpack.c.b16 %v196, %v196
  %v222 = vpack.c.b8 %v221, %v221
  %v223 = vpack.c.b16 %v197, %v197
  %v224 = vpack.c.b8 %v223, %v223
  %v225 = vpack.c.b16 %v198, %v198
  %v226 = vpack.c.b8 %v225, %v225
  %v227 = vpack.c.b16 %v199, %v199
  %v228 = vpack.c.b8 %v227, %v227
  %v229 = vpack.c.b16 %v200, %v200
  %v230 = vpack.c.b8 %v229, %v229
  %v231 = vpack.c.b16 %v201, %v201
  %v232 = vpack.c.b8 %v231, %v231
  %v233 = vpack.c.b16 %v202, %v202
  %v234 = vpack.c.b8 %v233, %v233
  %vm235 = vnez %v204
  %vm236 = vnez %v206
  %vm237 = vnez %v208
  %vm238 = vnez %v210
  %vm239 = vnez %v212
  %vm240 = vnez %v214
  %vm241 = vnez %v216
  %vm242 = vnez %v218
  %vm243 = vnez %v220
  %vm244 = vnez %v222
  %vm245 = vnez %v224
  %vm246 = vnez %v226
  %vm247 = vnez %v228
  %vm248 = vnez %v230
  %vm249 = vnez %v232
  %vm250 = vnez %v234
  %v251 = vsel %vm235, 16843009, 0
  %v252 = vsel %vm236, 16843009, 0
  %v253 = vsel %vm237, 16843009, 0
  %v254 = vsel %vm238, 16843009, 0
  %v255 = vsel %vm239, 16843009, 0
  %v256 = vsel %vm240, 16843009, 0
  %v257 = vsel %vm241, 16843009, 0
  %v258 = vsel %vm242, 16843009, 0
  %v259 = vsel %vm243, 16843009, 0
  %v260 = vsel %vm244, 16843009, 0
  %v261 = vsel %vm245, 16843009, 0
  %v262 = vsel %vm246, 16843009, 0
  %v263 = vsel %vm247, 16843009, 0
  %v264 = vsel %vm248, 16843009, 0
  %v265 = vsel %vm249, 16843009, 0
  %v266 = vsel %vm250, 16843009, 0
  %v267 = vunpack.c.0.s8 %v251
  %v268 = vunpack.c.0.s8 %v252
  %v269 = vunpack.c.0.s8 %v253
  %v270 = vunpack.c.0.s8 %v254
  %v271 = vunpack.c.0.s8 %v255
  %v272 = vunpack.c.0.s8 %v256
  %v273 = vunpack.c.0.s8 %v257
  %v274 = vunpack.c.0.s8 %v258
  %v275 = vunpack.c.0.s8 %v259
  %v276 = vunpack.c.0.s8 %v260
  %v277 = vunpack.c.0.s8 %v261
  %v278 = vunpack.c.0.s8 %v262
  %v279 = vunpack.c.0.s8 %v263
  %v280 = vunpack.c.0.s8 %v264
  %v281 = vunpack.c.0.s8 %v265
  %v282 = vunpack.c.0.s8 %v266
  %vm283 = vcmp.ne.s32.totalorder %v267, 0
  %vm284 = vcmp.ne.s32.totalorder %v268, 0
  %vm285 = vcmp.ne.s32.totalorder %v269, 0
  %vm286 = vcmp.ne.s32.totalorder %v270, 0
  %vm287 = vcmp.ne.s32.totalorder %v271, 0
  %vm288 = vcmp.ne.s32.totalorder %v272, 0
  %vm289 = vcmp.ne.s32.totalorder %v273, 0
  %vm290 = vcmp.ne.s32.totalorder %v274, 0
  %vm291 = vcmp.ne.s32.totalorder %v275, 0
  %vm292 = vcmp.ne.s32.totalorder %v276, 0
  %vm293 = vcmp.ne.s32.totalorder %v277, 0
  %vm294 = vcmp.ne.s32.totalorder %v278, 0
  %vm295 = vcmp.ne.s32.totalorder %v279, 0
  %vm296 = vcmp.ne.s32.totalorder %v280, 0
  %vm297 = vcmp.ne.s32.totalorder %v281, 0
  %vm298 = vcmp.ne.s32.totalorder %v282, 0
  %v299 = vsel %vm283, %v159, 0.0
  %v300 = vsel %vm284, %v160, 0.0
  %v301 = vsel %vm285, %v161, 0.0
  %v302 = vsel %vm286, %v162, 0.0
  %v303 = vsel %vm287, %v163, 0.0
  %v304 = vsel %vm288, %v164, 0.0
  %v305 = vsel %vm289, %v165, 0.0
  %v306 = vsel %vm290, %v166, 0.0
  %v307 = vsel %vm291, %v167, 0.0
  %v308 = vsel %vm292, %v168, 0.0
  %v309 = vsel %vm293, %v169, 0.0
  %v310 = vsel %vm294, %v170, 0.0
  %v311 = vsel %vm295, %v171, 0.0
  %v312 = vsel %vm296, %v172, 0.0
  %v313 = vsel %vm297, %v173, 0.0
  %v314 = vsel %vm298, %v174, 0.0
  %v315 = vld [vmem:[%s5] sm:$0xff]
  %v316 = vld [vmem:[%s5 + $0x8] sm:$0xff]
  %v317 = vld [vmem:[%s5 + $0x10] sm:$0xff]
  %v318 = vld [vmem:[%s5 + $0x18] sm:$0xff]
  %v319 = vld [vmem:[%s5 + $0x20] sm:$0xff]
  %v320 = vld [vmem:[%s5 + $0x28] sm:$0xff]
  %v321 = vld [vmem:[%s5 + $0x30] sm:$0xff]
  %v322 = vld [vmem:[%s5 + $0x38] sm:$0xff]
  %v323 = vld [vmem:[%s5 + $0x40] sm:$0xff]
  %v324 = vld [vmem:[%s5 + $0x48] sm:$0xff]
  %v325 = vld [vmem:[%s5 + $0x50] sm:$0xff]
  %v326 = vld [vmem:[%s5 + $0x58] sm:$0xff]
  %v327 = vld [vmem:[%s5 + $0x60] sm:$0xff]
  %v328 = vld [vmem:[%s5 + $0x68] sm:$0xff]
  %v329 = vld [vmem:[%s5 + $0x70] sm:$0xff]
  %v330 = vld [vmem:[%s5 + $0x78] sm:$0xff]
  %v331 = vld [vmem:[%s3] sm:$0xff]
  %v332 = vld [vmem:[%s3 + $0x8] sm:$0xff]
  %v333 = vld [vmem:[%s3 + $0x10] sm:$0xff]
  %v334 = vld [vmem:[%s3 + $0x18] sm:$0xff]
  %v335 = vld [vmem:[%s3 + $0x20] sm:$0xff]
  %v336 = vld [vmem:[%s3 + $0x28] sm:$0xff]
  %v337 = vld [vmem:[%s3 + $0x30] sm:$0xff]
  %v338 = vld [vmem:[%s3 + $0x38] sm:$0xff]
  %v339 = vld [vmem:[%s3 + $0x40] sm:$0xff]
  %v340 = vld [vmem:[%s3 + $0x48] sm:$0xff]
  %v341 = vld [vmem:[%s3 + $0x50] sm:$0xff]
  %v342 = vld [vmem:[%s3 + $0x58] sm:$0xff]
  %v343 = vld [vmem:[%s3 + $0x60] sm:$0xff]
  %v344 = vld [vmem:[%s3 + $0x68] sm:$0xff]
  %v345 = vld [vmem:[%s3 + $0x70] sm:$0xff]
  %v346 = vld [vmem:[%s3 + $0x78] sm:$0xff]
  %347 = vmatpush.msra.mxu0 %v346
  %348 = vmatpush.msra.mxu0 %v345
  %349 = vmatpush.msra.mxu0 %v344
  %350 = vmatpush.msra.mxu0 %v343
  %351 = vmatpush.msra.mxu0 %v342
  %352 = vmatpush.msra.mxu0 %v341
  %353 = vmatpush.msra.mxu0 %v340
  %354 = vmatpush.msra.mxu0 %v339
  %355 = vmatpush.msra.mxu0 %v338
  %356 = vmatpush.msra.mxu0 %v337
  %357 = vmatpush.msra.mxu0 %v336
  %358 = vmatpush.msra.mxu0 %v335
  %359 = vmatpush.msra.mxu0 %v334
  %360 = vmatpush.msra.mxu0 %v333
  %361 = vmatpush.msra.mxu0 %v332
  %362 = vmatpush.msra.mxu0 %v331
  %363 = vmatmul.f32.gmra.mxu0 %v299
  %v364 = vpop.f32.mrf.mxu0
  %v365 = vadd.f32 0.0, %v364
  %366 = vmatmul.f32.gmra.mxu0 %v300
  %v367 = vpop.f32.mrf.mxu0
  %v368 = vadd.f32 0.0, %v367
  %369 = vmatmul.f32.gmra.mxu0 %v301
  %v370 = vpop.f32.mrf.mxu0
  %v371 = vadd.f32 0.0, %v370
  %372 = vmatmul.f32.gmra.mxu0 %v302
  %v373 = vpop.f32.mrf.mxu0
  %v374 = vadd.f32 0.0, %v373
  %375 = vmatmul.f32.gmra.mxu0 %v303
  %v376 = vpop.f32.mrf.mxu0
  %v377 = vadd.f32 0.0, %v376
  %378 = vmatmul.f32.gmra.mxu0 %v304
  %v379 = vpop.f32.mrf.mxu0
  %v380 = vadd.f32 0.0, %v379
  %381 = vmatmul.f32.gmra.mxu0 %v305
  %v382 = vpop.f32.mrf.mxu0
  %v383 = vadd.f32 0.0, %v382
  %384 = vmatmul.f32.gmra.mxu0 %v306
  %v385 = vpop.f32.mrf.mxu0
  %v386 = vadd.f32 0.0, %v385
  %387 = vmatmul.f32.gmra.mxu0 %v307
  %v388 = vpop.f32.mrf.mxu0
  %v389 = vadd.f32 0.0, %v388
  %390 = vmatmul.f32.gmra.mxu0 %v308
  %v391 = vpop.f32.mrf.mxu0
  %v392 = vadd.f32 0.0, %v391
  %393 = vmatmul.f32.gmra.mxu0 %v309
  %v394 = vpop.f32.mrf.mxu0
  %v395 = vadd.f32 0.0, %v394
  %396 = vmatmul.f32.gmra.mxu0 %v310
  %v397 = vpop.f32.mrf.mxu0
  %v398 = vadd.f32 0.0, %v397
  %399 = vmatmul.f32.gmra.mxu0 %v311
  %v400 = vpop.f32.mrf.mxu0
  %v401 = vadd.f32 0.0, %v400
  %402 = vmatmul.f32.gmra.mxu0 %v312
  %v403 = vpop.f32.mrf.mxu0
  %v404 = vadd.f32 0.0, %v403
  %405 = vmatmul.f32.gmra.mxu0 %v313
  %v406 = vpop.f32.mrf.mxu0
  %v407 = vadd.f32 0.0, %v406
  %408 = vmatmul.f32.gmra.mxu0 %v314
  %v409 = vpop.f32.mrf.mxu0
  %v410 = vadd.f32 0.0, %v409
  %411 = vdwg.mxu0
  %v412 = vadd.f32 %v315, %v365
  %v413 = vadd.f32 %v316, %v368
  %v414 = vadd.f32 %v317, %v371
  %v415 = vadd.f32 %v318, %v374
  %v416 = vadd.f32 %v319, %v377
  %v417 = vadd.f32 %v320, %v380
  %v418 = vadd.f32 %v321, %v383
  %v419 = vadd.f32 %v322, %v386
  %v420 = vadd.f32 %v323, %v389
  %v421 = vadd.f32 %v324, %v392
  %v422 = vadd.f32 %v325, %v395
  %v423 = vadd.f32 %v326, %v398
  %v424 = vadd.f32 %v327, %v401
  %v425 = vadd.f32 %v328, %v404
  %v426 = vadd.f32 %v329, %v407
  %v427 = vadd.f32 %v330, %v410
  %vm428 = vcmask 261120
  %429 = vst.msk [vmem:[%s5] sm:$0xff] %vm428, %v412
  %430 = vst.msk [vmem:[%s5 + $0x8] sm:$0xff] %vm428, %v413
  %431 = vst.msk [vmem:[%s5 + $0x10] sm:$0xff] %vm428, %v414
  %432 = vst.msk [vmem:[%s5 + $0x18] sm:$0xff] %vm428, %v415
  %433 = vst.msk [vmem:[%s5 + $0x20] sm:$0xff] %vm428, %v416
  %434 = vst.msk [vmem:[%s5 + $0x28] sm:$0xff] %vm428, %v417
  %435 = vst.msk [vmem:[%s5 + $0x30] sm:$0xff] %vm428, %v418
  %436 = vst.msk [vmem:[%s5 + $0x38] sm:$0xff] %vm428, %v419
  %437 = vst.msk [vmem:[%s5 + $0x40] sm:$0xff] %vm428, %v420
  %438 = vst.msk [vmem:[%s5 + $0x48] sm:$0xff] %vm428, %v421
  %439 = vst.msk [vmem:[%s5 + $0x50] sm:$0xff] %vm428, %v422
  %440 = vst.msk [vmem:[%s5 + $0x58] sm:$0xff] %vm428, %v423
  %441 = vst.msk [vmem:[%s5 + $0x60] sm:$0xff] %vm428, %v424
  %442 = vst.msk [vmem:[%s5 + $0x68] sm:$0xff] %vm428, %v425
  %443 = vst.msk [vmem:[%s5 + $0x70] sm:$0xff] %vm428, %v426
  %444 = vst.msk [vmem:[%s5 + $0x78] sm:$0xff] %vm428, %v427
  // Predicated region
  $region26: #{fa_layer_forward.1} parent=0 // pred_check
    %p445 = pneg %p22
  $region27: #{fa_layer_forward.1} parent=0 // pred_check_branch
    %447 = sbr.rel (%p445) target = $region29
  $region28: #{fa_layer_forward.1} parent=0 // pred_region
    %v448 = vld [vmem:[%s5] sm:$0xff]
    %v449 = vld [vmem:[%s5 + $0x8] sm:$0xff]
    %v450 = vld [vmem:[%s5 + $0x10] sm:$0xff]
    %v451 = vld [vmem:[%s5 + $0x18] sm:$0xff]
    %v452 = vld [vmem:[%s5 + $0x20] sm:$0xff]
    %v453 = vld [vmem:[%s5 + $0x28] sm:$0xff]
    %v454 = vld [vmem:[%s5 + $0x30] sm:$0xff]
    %v455 = vld [vmem:[%s5 + $0x38] sm:$0xff]
    %v456 = vld [vmem:[%s5 + $0x40] sm:$0xff]
    %v457 = vld [vmem:[%s5 + $0x48] sm:$0xff]
    %v458 = vld [vmem:[%s5 + $0x50] sm:$0xff]
    %v459 = vld [vmem:[%s5 + $0x58] sm:$0xff]
    %v460 = vld [vmem:[%s5 + $0x60] sm:$0xff]
    %v461 = vld [vmem:[%s5 + $0x68] sm:$0xff]
    %v462 = vld [vmem:[%s5 + $0x70] sm:$0xff]
    %v463 = vld [vmem:[%s5 + $0x78] sm:$0xff]
    %v464 = vld [vmem:[%s4] sm:$0xff]
    %v465 = vld [vmem:[%s4 + $0x8] sm:$0xff]
    %v466 = vld [vmem:[%s4 + $0x10] sm:$0xff]
    %v467 = vld [vmem:[%s4 + $0x18] sm:$0xff]
    %v468 = vld [vmem:[%s4 + $0x20] sm:$0xff]
    %v469 = vld [vmem:[%s4 + $0x28] sm:$0xff]
    %v470 = vld [vmem:[%s4 + $0x30] sm:$0xff]
    %v471 = vld [vmem:[%s4 + $0x38] sm:$0xff]
    %v472 = vld [vmem:[%s4 + $0x40] sm:$0xff]
    %v473 = vld [vmem:[%s4 + $0x48] sm:$0xff]
    %v474 = vld [vmem:[%s4 + $0x50] sm:$0xff]
    %v475 = vld [vmem:[%s4 + $0x58] sm:$0xff]
    %v476 = vld [vmem:[%s4 + $0x60] sm:$0xff]
    %v477 = vld [vmem:[%s4 + $0x68] sm:$0xff]
    %v478 = vld [vmem:[%s4 + $0x70] sm:$0xff]
    %v479 = vld [vmem:[%s4 + $0x78] sm:$0xff]
    %481 = vset.pattern.permute.xlu0 0
    %482 = vperm.xlu0 %481, %v464
    %v483 = vpop.permute.xlu0 %482
    %486 = vset.pattern.permute.xlu0 0
    %487 = vperm.xlu0 %486, %v465
    %v488 = vpop.permute.xlu0 %487
    %491 = vset.pattern.permute.xlu0 0
    %492 = vperm.xlu0 %491, %v466
    %v493 = vpop.permute.xlu0 %492
    %496 = vset.pattern.permute.xlu0 0
    %497 = vperm.xlu0 %496, %v467
    %v498 = vpop.permute.xlu0 %497
    %501 = vset.pattern.permute.xlu0 0
    %502 = vperm.xlu0 %501, %v468
    %v503 = vpop.permute.xlu0 %502
    %506 = vset.pattern.permute.xlu0 0
    %507 = vperm.xlu0 %506, %v469
    %v508 = vpop.permute.xlu0 %507
    %511 = vset.pattern.permute.xlu0 0
    %512 = vperm.xlu0 %511, %v470
    %v513 = vpop.permute.xlu0 %512
    %516 = vset.pattern.permute.xlu0 0
    %517 = vperm.xlu0 %516, %v471
    %v518 = vpop.permute.xlu0 %517
    %521 = vset.pattern.permute.xlu0 0
    %522 = vperm.xlu0 %521, %v472
    %v523 = vpop.permute.xlu0 %522
    %526 = vset.pattern.permute.xlu0 0
    %527 = vperm.xlu0 %526, %v473
    %v528 = vpop.permute.xlu0 %527
    %531 = vset.pattern.permute.xlu0 0
    %532 = vperm.xlu0 %531, %v474
    %v533 = vpop.permute.xlu0 %532
    %536 = vset.pattern.permute.xlu0 0
    %537 = vperm.xlu0 %536, %v475
    %v538 = vpop.permute.xlu0 %537
    %541 = vset.pattern.permute.xlu0 0
    %542 = vperm.xlu0 %541, %v476
    %v543 = vpop.permute.xlu0 %542
    %546 = vset.pattern.permute.xlu0 0
    %547 = vperm.xlu0 %546, %v477
    %v548 = vpop.permute.xlu0 %547
    %551 = vset.pattern.permute.xlu0 0
    %552 = vperm.xlu0 %551, %v478
    %v553 = vpop.permute.xlu0 %552
    %556 = vset.pattern.permute.xlu0 0
    %557 = vperm.xlu0 %556, %v479
    %v558 = vpop.permute.xlu0 %557
    %v560 = vmul.f32 %v448, %v483
    %v561 = vmul.f32 %v449, %v488
    %v562 = vmul.f32 %v450, %v493
    %v563 = vmul.f32 %v451, %v498
    %v564 = vmul.f32 %v452, %v503
    %v565 = vmul.f32 %v453, %v508
    %v566 = vmul.f32 %v454, %v513
    %v567 = vmul.f32 %v455, %v518
    %v568 = vmul.f32 %v456, %v523
    %v569 = vmul.f32 %v457, %v528
    %v570 = vmul.f32 %v458, %v533
    %v571 = vmul.f32 %v459, %v538
    %v572 = vmul.f32 %v460, %v543
    %v573 = vmul.f32 %v461, %v548
    %v574 = vmul.f32 %v462, %v553
    %v575 = vmul.f32 %v463, %v558
    %576 = vst.msk [vmem:[%s5] sm:$0xff] %vm428, %v560
    %577 = vst.msk [vmem:[%s5 + $0x8] sm:$0xff] %vm428, %v561
    %578 = vst.msk [vmem:[%s5 + $0x10] sm:$0xff] %vm428, %v562
    %579 = vst.msk [vmem:[%s5 + $0x18] sm:$0xff] %vm428, %v563
    %580 = vst.msk [vmem:[%s5 + $0x20] sm:$0xff] %vm428, %v564
    %581 = vst.msk [vmem:[%s5 + $0x28] sm:$0xff] %vm428, %v565
    %582 = vst.msk [vmem:[%s5 + $0x30] sm:$0xff] %vm428, %v566
    %583 = vst.msk [vmem:[%s5 + $0x38] sm:$0xff] %vm428, %v567
    %584 = vst.msk [vmem:[%s5 + $0x40] sm:$0xff] %vm428, %v568
    %585 = vst.msk [vmem:[%s5 + $0x48] sm:$0xff] %vm428, %v569
    %586 = vst.msk [vmem:[%s5 + $0x50] sm:$0xff] %vm428, %v570
    %587 = vst.msk [vmem:[%s5 + $0x58] sm:$0xff] %vm428, %v571
    %588 = vst.msk [vmem:[%s5 + $0x60] sm:$0xff] %vm428, %v572
    %589 = vst.msk [vmem:[%s5 + $0x68] sm:$0xff] %vm428, %v573
    %590 = vst.msk [vmem:[%s5 + $0x70] sm:$0xff] %vm428, %v574
    %591 = vst.msk [vmem:[%s5 + $0x78] sm:$0xff] %vm428, %v575
  $region29: #{fa_layer_forward.1} parent=0 // pred_fallthru
    _
  // Predicated region
  $region30: #{fa_layer_forward.1} parent=0 // pred_check
    _
  $region31: #{fa_layer_forward.1} parent=0 // pred_check_branch
    %593 = sbr.rel (0) target = $region33
  $region32: #{fa_layer_forward.1} parent=0 // pred_region
    _
  $region33: #{fa_layer_forward.1} parent=0 // pred_fallthru
    _
  // Predicated region
  $region34: #{fa_layer_forward.1} parent=0 // pred_check
    _
  $region35: #{fa_layer_forward.1} parent=0 // pred_check_branch
    %595 = sbr.rel (0) target = $region37
  $region36: #{fa_layer_forward.1} parent=0 // pred_region
    _
  $region37: #{fa_layer_forward.1} parent=0 // pred_fallthru
    _

</llo_original>
